<compile_context>
chip_gen: v5e
topology: v5e:2x2
jax: 0.10.0
libtpu: 0.0.40
codegen_flags: <defaults>
</compile_context>

<pallas_src>
import functools

import numpy as np
import jax
import jax.numpy as jnp
from jax import lax
from jax.experimental import pallas as pl
from jax.experimental.pallas import tpu as pltpu


# ----------------------------- window (trace-time, numpy) -------------------

def _hann_window_np(M: int) -> np.ndarray:
    """torch.signal.windows.hann(M, sym=True): 0.5 - 0.5*cos(2*pi*n/(M-1))."""
    if M == 1:
        return np.ones((1,), np.float64)
    n = np.arange(M, dtype=np.float64)
    return 0.5 - 0.5 * np.cos(2.0 * np.pi * n / (M - 1))


def _window2d_np(K: int) -> np.ndarray:
    win = _hann_window_np(K)
    w2 = win[:, None] * win[None, :]
    return w2 / w2.max()


# ----------------------------- fused Pallas kernel --------------------------

def fused_kernel(x_ref, cw_ref, wt_ref, b_ref, o_ref, *, shifts, HW):
    """Fused pointwise + windowed-depthwise conv for one block of Bt batches.

    x_ref : (1, Bt*Cin, HW_pad)  input, spatial flattened onto lanes, zero-padded
    cw_ref: (Bt*Cout, Bt*Cin)    block-diagonal L2-normalized channel-mix weights
    wt_ref: (T_nz, Bt*Cout, 1)   nonzero Hann-windowed depthwise taps (leading-dim indexed)
    b_ref : (Bt*Cout, 1)         bias (tiled over the batch block)
    o_ref : (1, Bt*Cout, HW)     output slab; column p = oh*W + ow (ow >= OW is junk)
    """
    R = cw_ref.shape[0]                                   # Bt*Cout rows

    # ---- stage 1: 1x1 conv == ONE block-diagonal channel-mix matmul (MXU) ----
    # (For tiny Cin this could also be Cin VPU FMAs; the single wide matmul
    #  already amortizes push/drain over the whole batch block.)
    mid = jnp.dot(cw_ref[...], x_ref[0], preferred_element_type=jnp.float32)

    # ---- stage 2: windowed depthwise conv as shifted full-width lane slices ----
    # out[r, p] = bias[r] + sum_taps w[r, t] * mid[r, p + shift_t]
    # Padding of the input guarantees p + shift_t < HW_pad, so every slice is a
    # full HW-wide value slice (XLU rotate+select) and every op / the final
    # store is unmasked and lane-dense.
    acc = jnp.broadcast_to(b_ref[...], (R, HW)).astype(jnp.float32)
    for t, s in enumerate(shifts):                        # static, pruned tap loop
        acc = acc + mid[:, s:s + HW] * wt_ref[t]

    o_ref[0] = acc.astype(o_ref.dtype)                    # single full-width store


# ----------------------------- wrapper ---------------------------------------

def _pick_batch_block(N, Cin, Cout, HW, HW_pad):
    """Largest divisor of N that keeps >=2 grid steps (v7x: both TCs busy) and
    fits a ~8 MiB double-buffered VMEM budget (safe on every TPU generation)."""
    budget = 8 << 20
    min_steps = 2 if N >= 2 else 1
    best = 1
    for d in range(1, N + 1):
        if N % d != 0 or N // d < min_steps:
            continue
        footprint = 2 * 4 * (d * Cin * HW_pad + d * Cout * HW + d * d * Cout * Cin)
        if footprint <= budget:
            best = d
    return best


def separable_windowed_conv2d(x_nchw, channel_w, dw_w, bias, *, batch_block=None):
    """Forward pass of SeparableWindowedConv2D.

    x_nchw    : (N, Cin, H, W)
    channel_w : (Cout, Cin)    -- the (Cout, Cin, 1, 1) parameter squeezed
    dw_w      : (Cout, K, K)   -- spatial.conv.weight (groups=Cout) squeezed
    bias      : (Cout,)        -- spatial.conv.bias
    Returns (N, Cout, H-K+1, W-K+1)   (stride=1, padding=0, dilation=1)
    """
    N, Cin, H, W = x_nchw.shape
    Cout, K, _ = dw_w.shape
    OH, OW = H - K + 1, W - K + 1
    HW = H * W

    # ---- static (numpy) window + zero-tap pruning -------------------------
    w2_np = _window2d_np(K)                               # (K, K), exact zeros on border
    nz = np.flatnonzero(w2_np.reshape(-1))                # nonzero tap indices
    if nz.size == 0:                                      # degenerate all-zero window
        nz = np.array([0])
    shifts = tuple(int((t // K) * W + (t % K)) for t in nz)
    max_shift = max(shifts)

    # pad flattened spatial axis so every tap slice is full HW wide & in-bounds
    HW_pad = HW if max_shift == 0 else ((HW + max_shift + 127) // 128) * 128

    if batch_block is None:
        batch_block = _pick_batch_block(N, Cin, Cout, HW, HW_pad)
    Bt = batch_block
    assert N % Bt == 0, (N, Bt)
    G = N // Bt

    # ---- weight prep (tiny, trace-time JAX ops) ----------------------------
    # forward re-normalizes channel_weights every call
    cw = channel_w / jnp.maximum(
        jnp.sqrt(jnp.sum(channel_w * channel_w, axis=1, keepdims=True)), 1e-12)
    # block-diagonal channel mix so the whole batch block is ONE matmul
    cw_bd = jnp.einsum("ab,oc->aobc", jnp.eye(Bt, dtype=cw.dtype), cw)
    cw_bd = cw_bd.reshape(Bt * Cout, Bt * Cin)

    w_eff = dw_w * jnp.asarray(w2_np, jnp.float32)        # (Cout, K, K) windowed taps
    w_nz = w_eff.reshape(Cout, K * K)[:, nz]              # (Cout, T_nz) nonzero taps
    T = int(nz.size)
    wt_tiled = jnp.tile(jnp.transpose(w_nz)[:, None, :], (1, Bt, 1))
    wt_tiled = wt_tiled.reshape(T, Bt * Cout, 1)          # leading-dim tap index
    b_tiled = jnp.tile(bias[None, :], (Bt, 1)).reshape(Bt * Cout, 1)

    # ---- input layout: spatial onto lanes, batch folded onto sublanes ------
    x_flat = x_nchw.reshape(N, Cin, HW)
    if HW_pad > HW:
        x_flat = jnp.pad(x_flat, ((0, 0), (0, 0), (0, HW_pad - HW)))
    x_blk = x_flat.reshape(G, Bt * Cin, HW_pad)           # free reshapes, no transpose

    out = pl.pallas_call(
        functools.partial(fused_kernel, shifts=shifts, HW=HW),
        out_shape=jax.ShapeDtypeStruct((G, Bt * Cout, HW), jnp.float32),
        grid=(G,),
        in_specs=[
            pl.BlockSpec((1, Bt * Cin, HW_pad), lambda n: (n, 0, 0)),
            pl.BlockSpec((Bt * Cout, Bt * Cin), lambda n: (0, 0)),
            pl.BlockSpec((T, Bt * Cout, 1), lambda n: (0, 0, 0)),
            pl.BlockSpec((Bt * Cout, 1), lambda n: (0, 0)),
        ],
        out_specs=pl.BlockSpec((1, Bt * Cout, HW), lambda n: (n, 0, 0)),
        # batch-block axis is independent -> v7x shards it across its 2 TCs
        compiler_params=pltpu.CompilerParams(dimension_semantics=("parallel",)),
    )(x_blk, cw_bd, wt_tiled, b_tiled)

    # (G, Bt*Cout, HW) -> (N, Cout, H, W) is a free row-major reshape; slicing
    # the junk rows/cols recovers NCHW (N, Cout, OH, OW).
    return out.reshape(N, Cout, H, W)[:, :, :OH, :OW]


# ----------------------------- reference --------------------------------------

def reference(x_nchw, channel_w, dw_w, bias):
    Cout, K, _ = dw_w.shape
    cw = channel_w / jnp.maximum(
        jnp.sqrt(jnp.sum(channel_w * channel_w, axis=1, keepdims=True)), 1e-12)
    mid = lax.conv_general_dilated(
        x_nchw, cw[:, :, None, None], (1, 1), "VALID",
        dimension_numbers=("NCHW", "OIHW", "NCHW"))
    w_eff = dw_w * jnp.asarray(_window2d_np(K), jnp.float32)
    out = lax.conv_general_dilated(
        mid, w_eff[:, None, :, :], (1, 1), "VALID",
        feature_group_count=Cout,
        dimension_numbers=("NCHW", "OIHW", "NCHW"))
    return out + bias[None, :, None, None]


if __name__ == "__main__":
    key = jax.random.PRNGKey(0)
    k1, k2, k3, k4 = jax.random.split(key, 4)

    # Module config: in_channels=4, out_channels=8, kernel_size=5,
    # stride=1, padding=0, dilation=1, bias=True, window='hann'.
    N, Cin, H, W = 2, 4, 16, 16
    Cout, K = 8, 5

    x = jax.random.normal(k1, (N, Cin, H, W), jnp.float32)
    channel_w = jax.random.normal(k2, (Cout, Cin), jnp.float32)
    channel_w = channel_w / jnp.sqrt(
        jnp.sum(channel_w * channel_w, axis=1, keepdims=True))
    dw_w = jax.random.normal(k3, (Cout, K, K), jnp.float32) * 0.2
    bias = jax.random.uniform(k4, (Cout,), jnp.float32, minval=-0.2, maxval=0.2)

    fwd = jax.jit(separable_windowed_conv2d)
    out = jax.block_until_ready(fwd(x, channel_w, dw_w, bias))

    ref = reference(x, channel_w, dw_w, bias)
    assert out.shape == (N, Cout, H - K + 1, W - K + 1), out.shape
    assert jnp.allclose(out, ref, atol=1e-4, rtol=1e-4), float(jnp.abs(out - ref).max())
    print("KERNEL_OK")
</pallas_src>

<mosaic_0001>
module attributes {stable_mosaic.version = 11 : i64} {
  func.func @fused_kernel(%arg0: i32, %arg1: memref<1x4x384xf32, #tpu.memory_space<vmem>>, %arg2: memref<8x4xf32, #tpu.memory_space<vmem>>, %arg3: memref<9x8x1xf32, #tpu.memory_space<vmem>>, %arg4: memref<8x1xf32, #tpu.memory_space<vmem>>, %arg5: memref<1x8x256xf32, #tpu.memory_space<vmem>>) attributes {dimension_semantics = [#tpu.dimension_semantics<parallel>], iteration_bounds = array<i64: 2>, scalar_prefetch = 0 : i64, scratch_operands = 0 : i64, tpu.core_type = #tpu.core_type<tc>, window_params = [{transform_indices = @transform_0, window_bounds = array<i64: 1, 4, 384>}, {pipeline_mode = #tpu.pipeline_mode<synchronous>, transform_indices = @transform_1, window_bounds = array<i64: 8, 4>}, {pipeline_mode = #tpu.pipeline_mode<synchronous>, transform_indices = @transform_2, window_bounds = array<i64: 9, 8, 1>}, {pipeline_mode = #tpu.pipeline_mode<synchronous>, transform_indices = @transform_3, window_bounds = array<i64: 8, 1>}, {transform_indices = @transform_4, window_bounds = array<i64: 1, 8, 256>}]} {
    %c0 = arith.constant 0 : index
    %c0_0 = arith.constant 0 : index
    %0 = vector.load %arg2[%c0, %c0_0] : memref<8x4xf32, #tpu.memory_space<vmem>>, vector<8x4xf32>
    %c0_1 = arith.constant 0 : index
    %c0_2 = arith.constant 0 : index
    %c0_3 = arith.constant 0 : index
    %1 = vector.load %arg1[%c0_1, %c0_2, %c0_3] : memref<1x4x384xf32, #tpu.memory_space<vmem>>, vector<1x4x384xf32>
    %2 = vector.shape_cast %1 : vector<1x4x384xf32> to vector<4x384xf32>
    %cst = arith.constant dense<0.000000e+00> : vector<8x384xf32>
    %3 = tpu.matmul %0, %2, %cst {dimension_numbers = #tpu.dot_dimension_numbers<[1], [0], [0], [1], [0, 0, 1, 1], [], []>} : vector<8x4xf32>, vector<4x384xf32>, vector<8x384xf32> -> vector<8x384xf32>
    %c0_4 = arith.constant 0 : index
    %c0_5 = arith.constant 0 : index
    %4 = vector.load %arg4[%c0_4, %c0_5] : memref<8x1xf32, #tpu.memory_space<vmem>>, vector<8x1xf32>
    %5 = vector.shape_cast %4 : vector<8x1xf32> to vector<8x1xf32>
    %6 = vector.broadcast %5 : vector<8x1xf32> to vector<8x256xf32>
    %7 = vector.extract_strided_slice %3 {offsets = [0, 17], sizes = [8, 256], strides = [1, 1]} : vector<8x384xf32> to vector<8x256xf32>
    %c0_6 = arith.constant 0 : index
    %c0_7 = arith.constant 0 : index
    %c0_8 = arith.constant 0 : index
    %8 = vector.load %arg3[%c0_6, %c0_7, %c0_8] : memref<9x8x1xf32, #tpu.memory_space<vmem>>, vector<1x8x1xf32>
    %9 = vector.shape_cast %8 : vector<1x8x1xf32> to vector<8x1xf32>
    %10 = vector.broadcast %9 : vector<8x1xf32> to vector<8x256xf32>
    %11 = arith.mulf %7, %10 : vector<8x256xf32>
    %12 = arith.addf %6, %11 : vector<8x256xf32>
    %13 = vector.extract_strided_slice %3 {offsets = [0, 18], sizes = [8, 256], strides = [1, 1]} : vector<8x384xf32> to vector<8x256xf32>
    %c1 = arith.constant 1 : index
    %c0_9 = arith.constant 0 : index
    %c0_10 = arith.constant 0 : index
    %14 = vector.load %arg3[%c1, %c0_9, %c0_10] : memref<9x8x1xf32, #tpu.memory_space<vmem>>, vector<1x8x1xf32>
    %15 = vector.shape_cast %14 : vector<1x8x1xf32> to vector<8x1xf32>
    %16 = vector.broadcast %15 : vector<8x1xf32> to vector<8x256xf32>
    %17 = arith.mulf %13, %16 : vector<8x256xf32>
    %18 = arith.addf %12, %17 : vector<8x256xf32>
    %19 = vector.extract_strided_slice %3 {offsets = [0, 19], sizes = [8, 256], strides = [1, 1]} : vector<8x384xf32> to vector<8x256xf32>
    %c2 = arith.constant 2 : index
    %c0_11 = arith.constant 0 : index
    %c0_12 = arith.constant 0 : index
    %20 = vector.load %arg3[%c2, %c0_11, %c0_12] : memref<9x8x1xf32, #tpu.memory_space<vmem>>, vector<1x8x1xf32>
    %21 = vector.shape_cast %20 : vector<1x8x1xf32> to vector<8x1xf32>
    %22 = vector.broadcast %21 : vector<8x1xf32> to vector<8x256xf32>
    %23 = arith.mulf %19, %22 : vector<8x256xf32>
    %24 = arith.addf %18, %23 : vector<8x256xf32>
    %25 = vector.extract_strided_slice %3 {offsets = [0, 33], sizes = [8, 256], strides = [1, 1]} : vector<8x384xf32> to vector<8x256xf32>
    %c3 = arith.constant 3 : index
    %c0_13 = arith.constant 0 : index
    %c0_14 = arith.constant 0 : index
    %26 = vector.load %arg3[%c3, %c0_13, %c0_14] : memref<9x8x1xf32, #tpu.memory_space<vmem>>, vector<1x8x1xf32>
    %27 = vector.shape_cast %26 : vector<1x8x1xf32> to vector<8x1xf32>
    %28 = vector.broadcast %27 : vector<8x1xf32> to vector<8x256xf32>
    %29 = arith.mulf %25, %28 : vector<8x256xf32>
    %30 = arith.addf %24, %29 : vector<8x256xf32>
    %31 = vector.extract_strided_slice %3 {offsets = [0, 34], sizes = [8, 256], strides = [1, 1]} : vector<8x384xf32> to vector<8x256xf32>
    %c4 = arith.constant 4 : index
    %c0_15 = arith.constant 0 : index
    %c0_16 = arith.constant 0 : index
    %32 = vector.load %arg3[%c4, %c0_15, %c0_16] : memref<9x8x1xf32, #tpu.memory_space<vmem>>, vector<1x8x1xf32>
    %33 = vector.shape_cast %32 : vector<1x8x1xf32> to vector<8x1xf32>
    %34 = vector.broadcast %33 : vector<8x1xf32> to vector<8x256xf32>
    %35 = arith.mulf %31, %34 : vector<8x256xf32>
    %36 = arith.addf %30, %35 : vector<8x256xf32>
    %37 = vector.extract_strided_slice %3 {offsets = [0, 35], sizes = [8, 256], strides = [1, 1]} : vector<8x384xf32> to vector<8x256xf32>
    %c5 = arith.constant 5 : index
    %c0_17 = arith.constant 0 : index
    %c0_18 = arith.constant 0 : index
    %38 = vector.load %arg3[%c5, %c0_17, %c0_18] : memref<9x8x1xf32, #tpu.memory_space<vmem>>, vector<1x8x1xf32>
    %39 = vector.shape_cast %38 : vector<1x8x1xf32> to vector<8x1xf32>
    %40 = vector.broadcast %39 : vector<8x1xf32> to vector<8x256xf32>
    %41 = arith.mulf %37, %40 : vector<8x256xf32>
    %42 = arith.addf %36, %41 : vector<8x256xf32>
    %43 = vector.extract_strided_slice %3 {offsets = [0, 49], sizes = [8, 256], strides = [1, 1]} : vector<8x384xf32> to vector<8x256xf32>
    %c6 = arith.constant 6 : index
    %c0_19 = arith.constant 0 : index
    %c0_20 = arith.constant 0 : index
    %44 = vector.load %arg3[%c6, %c0_19, %c0_20] : memref<9x8x1xf32, #tpu.memory_space<vmem>>, vector<1x8x1xf32>
    %45 = vector.shape_cast %44 : vector<1x8x1xf32> to vector<8x1xf32>
    %46 = vector.broadcast %45 : vector<8x1xf32> to vector<8x256xf32>
    %47 = arith.mulf %43, %46 : vector<8x256xf32>
    %48 = arith.addf %42, %47 : vector<8x256xf32>
    %49 = vector.extract_strided_slice %3 {offsets = [0, 50], sizes = [8, 256], strides = [1, 1]} : vector<8x384xf32> to vector<8x256xf32>
    %c7 = arith.constant 7 : index
    %c0_21 = arith.constant 0 : index
    %c0_22 = arith.constant 0 : index
    %50 = vector.load %arg3[%c7, %c0_21, %c0_22] : memref<9x8x1xf32, #tpu.memory_space<vmem>>, vector<1x8x1xf32>
    %51 = vector.shape_cast %50 : vector<1x8x1xf32> to vector<8x1xf32>
    %52 = vector.broadcast %51 : vector<8x1xf32> to vector<8x256xf32>
    %53 = arith.mulf %49, %52 : vector<8x256xf32>
    %54 = arith.addf %48, %53 : vector<8x256xf32>
    %55 = vector.extract_strided_slice %3 {offsets = [0, 51], sizes = [8, 256], strides = [1, 1]} : vector<8x384xf32> to vector<8x256xf32>
    %c8 = arith.constant 8 : index
    %c0_23 = arith.constant 0 : index
    %c0_24 = arith.constant 0 : index
    %56 = vector.load %arg3[%c8, %c0_23, %c0_24] : memref<9x8x1xf32, #tpu.memory_space<vmem>>, vector<1x8x1xf32>
    %57 = vector.shape_cast %56 : vector<1x8x1xf32> to vector<8x1xf32>
    %58 = vector.broadcast %57 : vector<8x1xf32> to vector<8x256xf32>
    %59 = arith.mulf %55, %58 : vector<8x256xf32>
    %60 = arith.addf %54, %59 : vector<8x256xf32>
    %c0_25 = arith.constant 0 : index
    %c0_26 = arith.constant 0 : index
    %c0_27 = arith.constant 0 : index
    %61 = vector.load %arg5[%c0_25, %c0_26, %c0_27] : memref<1x8x256xf32, #tpu.memory_space<vmem>>, vector<1x8x256xf32>
    %62 = vector.shape_cast %61 : vector<1x8x256xf32> to vector<8x256xf32>
    %63 = vector.shape_cast %60 : vector<8x256xf32> to vector<1x8x256xf32>
    tpu.vector_store %arg5[%c0_25, %c0_26, %c0_27], %63 {strides = array<i32>} : memref<1x8x256xf32, #tpu.memory_space<vmem>>, vector<1x8x256xf32>,
    return
  }
  func.func @transform_0(%arg0: i32) -> (i32, i32, i32) {
    %c0_i32 = arith.constant 0 : i32
    %c0_i32_0 = arith.constant 0 : i32
    %c0_i32_1 = arith.constant 0 : i32
    return %arg0, %c0_i32, %c0_i32_0 : i32, i32, i32
  }
  func.func @transform_1(%arg0: i32) -> (i32, i32) {
    %c0_i32 = arith.constant 0 : i32
    %c0_i32_0 = arith.constant 0 : i32
    %c0_i32_1 = arith.constant 0 : i32
    return %c0_i32, %c0_i32_0 : i32, i32
  }
  func.func @transform_2(%arg0: i32) -> (i32, i32, i32) {
    %c0_i32 = arith.constant 0 : i32
    %c0_i32_0 = arith.constant 0 : i32
    %c0_i32_1 = arith.constant 0 : i32
    %c0_i32_2 = arith.constant 0 : i32
    return %c0_i32, %c0_i32_0, %c0_i32_1 : i32, i32, i32
  }
  func.func @transform_3(%arg0: i32) -> (i32, i32) {
    %c0_i32 = arith.constant 0 : i32
    %c0_i32_0 = arith.constant 0 : i32
    %c0_i32_1 = arith.constant 0 : i32
    return %c0_i32, %c0_i32_0 : i32, i32
  }
  func.func @transform_4(%arg0: i32) -> (i32, i32, i32) {
    %c0_i32 = arith.constant 0 : i32
    %c0_i32_0 = arith.constant 0 : i32
    %c0_i32_1 = arith.constant 0 : i32
    return %arg0, %c0_i32, %c0_i32_0 : i32, i32, i32
  }
}

</mosaic_0001>

<llo_original>
// kernel: separable_windowed_conv2d.1
$region0: #{separable_windowed_conv2d.1}
  #allocation0 [shape = 'u32[]', space=smem, size = 0x4, offset = 0x4, fixed_abs, tag = 'smem constant byte address 0x4 - core index']
  #allocation1 [shape = 'u32[72,128]{1,0:T(1,128)}', space=vmem, size = 0x9000, scoped, tag = 'internal scratch']
  %s0 = inlined_call_operand.vmem [shape: f32[2,4,384], index: 0, kind: input, shape index: {}]
  %s1 = inlined_call_operand.vmem [shape: f32[8,4], index: 1, kind: input, shape index: {}]
  %s2 = inlined_call_operand.vmem [shape: f32[9,8,1], index: 2, kind: input, shape index: {}]
  %s3 = inlined_call_operand.vmem [shape: f32[8,1], index: 3, kind: input, shape index: {}]
  %s4 = inlined_call_operand.vmem [shape: f32[2,8,256], index: 4, kind: output, shape index: {}]
  %s5 = sld [smem:[#allocation0]]
  $region49: #{separable_windowed_conv2d.1} parent=0
    _
  %s7 = ssub.s32 1, %s5
  %s8 = scalar_select 0, %s7, %s5
  loop: start=0, step=1, limit=4
  $region2: #{separable_windowed_conv2d.1} parent=0 // loop_pre_header
    _
  $region3: #{separable_windowed_conv2d.1} parent=0 // loop_header
    %s10 = sphi 0, %s14
    %p11 = scmp.ge.s32.totalorder %s10, 4
    %s20 = sphi 0, %s22
    %s23 = sphi 0, %s20
    %s24 = sphi 0, %s23
    %s40 = sphi 0, %s24
    %s44 = sphi 0, %s44
    %s46 = sphi 0, %s44
    %s47 = sphi 0, %s46
    %s61 = sphi 0, %s47
    %s65 = sphi 0, %s65
    %s67 = sphi 0, %s65
    %s68 = sphi 0, %s67
    %s82 = sphi 0, %s68
    %s86 = sphi 0, %s86
    %s88 = sphi 0, %s86
    %s89 = sphi 0, %s88
    %s103 = sphi 0, %s89
    %s109 = sphi 0, %s111
    %s112 = sphi 0, %s109
    %s113 = sphi 0, %s112
    %s129 = sphi 0, %s113
  $region4: #{separable_windowed_conv2d.1} parent=0 // loop_header_branch
    %13 = sbr.rel (%p11) target = $region8
  $region5: #{separable_windowed_conv2d.1} parent=0 // loop_body
    %s15 = ssub.s32 %s10, 1
    %s16 = ssub.s32 %s10, 2
    %s17 = sadd.s32 %s10, 1
    %s18 = ssub.s32 %s10, %s17
    %p19 = scmp.eq.s32.totalorder %s18, 0
    %s21 = sadd.s32 %s20, 1
    %s22 = scalar_select %p19, %s20, %s21
    %p25 = pneg %p19
    %p26 = scmp.eq.s32.totalorder %s10, 1
    %p27 = por %p25, %p26
    %p28 = scmp.ne.s32.totalorder %s20, %s23
    %p29 = scmp.eq.s32.totalorder %s10, 0
    %p30 = por %p28, %p29
    %p31 = scmp.ne.s32.totalorder %s20, %s23
    %p32 = scmp.eq.s32.totalorder %s15, 1
    %p33 = por %p31, %p32
    %p34 = scmp.ne.s32.totalorder %s23, %s24
    %p35 = scmp.eq.s32.totalorder %s15, 0
    %p36 = por %p34, %p35
    %p37 = scmp.ne.s32.totalorder %s23, %s24
    %p38 = scmp.eq.s32.totalorder %s16, 1
    %p39 = por %p37, %p38
    %p41 = scmp.ne.s32.totalorder %s24, %s40
    %p42 = scmp.eq.s32.totalorder %s16, 0
    %p43 = por %p41, %p42
    %s45 = sadd.s32 %s44, 1
    %p48 = scmp.eq.s32.totalorder %s10, 1
    %p49 = scmp.ne.s32.totalorder %s44, %s46
    %p50 = scmp.eq.s32.totalorder %s10, 0
    %p51 = por %p49, %p50
    %p52 = scmp.ne.s32.totalorder %s44, %s46
    %p53 = scmp.eq.s32.totalorder %s15, 1
    %p54 = por %p52, %p53
    %p55 = scmp.ne.s32.totalorder %s46, %s47
    %p56 = scmp.eq.s32.totalorder %s15, 0
    %p57 = por %p55, %p56
    %p58 = scmp.ne.s32.totalorder %s46, %s47
    %p59 = scmp.eq.s32.totalorder %s16, 1
    %p60 = por %p58, %p59
    %p62 = scmp.ne.s32.totalorder %s47, %s61
    %p63 = scmp.eq.s32.totalorder %s16, 0
    %p64 = por %p62, %p63
    %s66 = sadd.s32 %s65, 1
    %p69 = scmp.eq.s32.totalorder %s10, 1
    %p70 = scmp.ne.s32.totalorder %s65, %s67
    %p71 = scmp.eq.s32.totalorder %s10, 0
    %p72 = por %p70, %p71
    %p73 = scmp.ne.s32.totalorder %s65, %s67
    %p74 = scmp.eq.s32.totalorder %s15, 1
    %p75 = por %p73, %p74
    %p76 = scmp.ne.s32.totalorder %s67, %s68
    %p77 = scmp.eq.s32.totalorder %s15, 0
    %p78 = por %p76, %p77
    %p79 = scmp.ne.s32.totalorder %s67, %s68
    %p80 = scmp.eq.s32.totalorder %s16, 1
    %p81 = por %p79, %p80
    %p83 = scmp.ne.s32.totalorder %s68, %s82
    %p84 = scmp.eq.s32.totalorder %s16, 0
    %p85 = por %p83, %p84
    %s87 = sadd.s32 %s86, 1
    %p90 = scmp.eq.s32.totalorder %s10, 1
    %p91 = scmp.ne.s32.totalorder %s86, %s88
    %p92 = scmp.eq.s32.totalorder %s10, 0
    %p93 = por %p91, %p92
    %p94 = scmp.ne.s32.totalorder %s86, %s88
    %p95 = scmp.eq.s32.totalorder %s15, 1
    %p96 = por %p94, %p95
    %p97 = scmp.ne.s32.totalorder %s88, %s89
    %p98 = scmp.eq.s32.totalorder %s15, 0
    %p99 = por %p97, %p98
    %p100 = scmp.ne.s32.totalorder %s88, %s89
    %p101 = scmp.eq.s32.totalorder %s16, 1
    %p102 = por %p100, %p101
    %p104 = scmp.ne.s32.totalorder %s89, %s103
    %p105 = scmp.eq.s32.totalorder %s16, 0
    %p106 = por %p104, %p105
    %s107 = ssub.s32 %s10, %s17
    %p108 = scmp.eq.s32.totalorder %s107, 0
    %s110 = sadd.s32 %s109, 1
    %s111 = scalar_select %p108, %s109, %s110
    %p114 = pneg %p108
    %p115 = scmp.eq.s32.totalorder %s10, 1
    %p116 = por %p114, %p115
    %p117 = scmp.ne.s32.totalorder %s109, %s112
    %p118 = scmp.eq.s32.totalorder %s10, 0
    %p119 = por %p117, %p118
    %p120 = scmp.ne.s32.totalorder %s109, %s112
    %p121 = scmp.eq.s32.totalorder %s15, 1
    %p122 = por %p120, %p121
    %p123 = scmp.ne.s32.totalorder %s112, %s113
    %p124 = scmp.eq.s32.totalorder %s15, 0
    %p125 = por %p123, %p124
    %p126 = scmp.ne.s32.totalorder %s112, %s113
    %p127 = scmp.eq.s32.totalorder %s16, 1
    %p128 = por %p126, %p127
    %p130 = scmp.ne.s32.totalorder %s113, %s129
    %p131 = scmp.eq.s32.totalorder %s16, 0
    %p132 = por %p130, %p131
    %p133 = scmp.le.s32.totalorder 1, %s10
    %p134 = scmp.lt.s32.totalorder %s10, 3
    %p135 = pnand %p133, %p134
    %p136 = pneg %p135
    // Predicated region
    $region9: #{separable_windowed_conv2d.1} parent=5 // pred_check
      _
    $region10: #{separable_windowed_conv2d.1} parent=5 // pred_check_branch
      %138 = sbr.rel (%p135) target = $region12
    $region11: #{separable_windowed_conv2d.1} parent=5 // pred_region
      %s139 = ssub.s32 %s10, 1
      // Predicated region
      $region13: #{separable_windowed_conv2d.1} parent=11 // pred_check
        %p140 = pneg %p57
      $region14: #{separable_windowed_conv2d.1} parent=11 // pred_check_branch
        %142 = sbr.rel (%p140) target = $region16
      $region15: #{separable_windowed_conv2d.1} parent=11 // pred_region
        _
      $region16: #{separable_windowed_conv2d.1} parent=11 // pred_fallthru
        _
      // Predicated region
      $region17: #{separable_windowed_conv2d.1} parent=11 // pred_check
        %p143 = pneg %p78
      $region18: #{separable_windowed_conv2d.1} parent=11 // pred_check_branch
        %145 = sbr.rel (%p143) target = $region20
      $region19: #{separable_windowed_conv2d.1} parent=11 // pred_region
        _
      $region20: #{separable_windowed_conv2d.1} parent=11 // pred_fallthru
        _
      // Predicated region
      $region21: #{separable_windowed_conv2d.1} parent=11 // pred_check
        %p146 = pneg %p99
      $region22: #{separable_windowed_conv2d.1} parent=11 // pred_check_branch
        %148 = sbr.rel (%p146) target = $region24
      $region23: #{separable_windowed_conv2d.1} parent=11 // pred_region
        _
      $region24: #{separable_windowed_conv2d.1} parent=11 // pred_fallthru
        _
    $region12: #{separable_windowed_conv2d.1} parent=5 // pred_fallthru
      _
    %p149 = scmp.lt.s32.totalorder %s10, 2
    // Predicated region
    $region25: #{separable_windowed_conv2d.1} parent=5 // pred_check
      %p150 = pneg %p149
    $region26: #{separable_windowed_conv2d.1} parent=5 // pred_check_branch
      %152 = sbr.rel (%p150) target = $region28
    $region27: #{separable_windowed_conv2d.1} parent=5 // pred_region
      // Predicated region
      $region29: #{separable_windowed_conv2d.1} parent=27 // pred_check
        %p153 = pneg %p30
      $region30: #{separable_windowed_conv2d.1} parent=27 // pred_check_branch
        %155 = sbr.rel (%p153) target = $region32
      $region31: #{separable_windowed_conv2d.1} parent=27 // pred_region
        %p156 = scmp.lt.s32.totalorder %s10, 1
        %s157 = scalar_select %p156, %s10, 1
        %s158 = smul.addr %s157, 3
        %s159 = smul.addr %s158, 4
        %s160 = scalar_lea.vmem %s0, %s159
      $region32: #{separable_windowed_conv2d.1} parent=27 // pred_fallthru
        _
    $region28: #{separable_windowed_conv2d.1} parent=5 // pred_fallthru
      _
    %p161 = scmp.le.s32.totalorder 1, %s10
    %p162 = scmp.lt.s32.totalorder %s10, 3
    %p163 = pnand %p161, %p162
    %p164 = pneg %p163
    // Predicated region
    $region33: #{separable_windowed_conv2d.1} parent=5 // pred_check
      _
    $region34: #{separable_windowed_conv2d.1} parent=5 // pred_check_branch
      %166 = sbr.rel (%p163) target = $region36
    $region35: #{separable_windowed_conv2d.1} parent=5 // pred_region
      %s167 = ssub.s32 %s10, 1
      %p168 = scmp.lt.s32.totalorder %s15, 1
      %s169 = scalar_select %p168, %s15, 1
      %s170 = smul.addr %s169, 3
      %s171 = smul.addr %s170, 4
      %s172 = scalar_lea.vmem %s0, %s171
      %p173 = pneg %p36
      %p174 = pneg %p33
      %p175 = pneg %p57
      %p176 = pneg %p54
      %p177 = pneg %p78
      %p178 = pneg %p75
      %p179 = pneg %p99
      %p180 = pneg %p96
      %p181 = pneg %p125
      %p182 = pneg %p122
      %p183 = scmp.lt.s32.totalorder %s15, 1
      %s184 = scalar_select %p183, %s15, 1
      %s185 = smul.addr %s184, 2
      %s186 = smul.addr %s185, 8
      %s187 = scalar_lea.vmem %s4, %s186
      %p188 = scmp.lt.s32.totalorder %s15, 1
      %s189 = scalar_select %p188, %s15, 1
      %s190 = smul.addr %s189, 3
      %s191 = smul.addr %s190, 4
      %s192 = scalar_lea.vmem %s0, %s191
      %p193 = scmp.lt.s32.totalorder %s15, 1
      %s194 = scalar_select %p193, %s15, 1
      %s195 = smul.addr %s194, 2
      %s196 = smul.addr %s195, 8
      %s197 = scalar_lea.vmem %s4, %s196
      %v198 = vld [vmem:[%s1] sm:$0xff]
      %v199 = vld [vmem:[%s192] sm:$0xff]
      %v200 = vld [vmem:[%s192 + $0x8] sm:$0xf]
      %203 = vst [vmem:[#allocation1] ss:$2 sm:$0xff] %v199
      %s204 = scalar_lea.vmem [#allocation1], 16
      %205 = vst [vmem:[%s204] ss:$2 sm:$0xff] %v200
      %v206 = vld.sshfl [vmem:[#allocation1] sm:$0xff pattern:$0x75316420]
      %v207 = vld.sshfl [vmem:[#allocation1 + $0x8] sm:$0xff pattern:$0x75316420]
      %v208 = vld.sshfl [vmem:[#allocation1 + $0x10] sm:$0xff pattern:$0x75316420]
      %vm209 = vcmask 31744
      %v211 = vsel %vm209, %v198, 0
      %vm213 = vcmask 1043456
      %v214 = vsel %vm213, %v206, 0
      %v216 = vsel %vm213, %v207, 0
      %v218 = vsel %vm213, %v208, 0
      %220 = vmatpush.msra.mxu0 0.0
      %221 = vmatpush.msra.mxu0 0.0
      %222 = vmatpush.msra.mxu0 0.0
      %223 = vmatpush.msra.mxu0 0.0
      %224 = vmatpush.msra.mxu0 0.0
      %225 = vmatpush.msra.mxu0 0.0
      %226 = vmatpush.msra.mxu0 0.0
      %227 = vmatpush.msra.mxu0 0.0
      %228 = vmatpush.msra.mxu0 0.0
      %229 = vmatpush.msra.mxu0 0.0
      %230 = vmatpush.msra.mxu0 0.0
      %231 = vmatpush.msra.mxu0 0.0
      %232 = vmatpush.msra.mxu0 0.0
      %233 = vmatpush.msra.mxu0 0.0
      %234 = vmatpush.msra.mxu0 0.0
      %235 = vmatpush.msra.mxu0 %v214
      %236 = vmatmul.f32.gmra.mxu0 %v211
      %v237 = vpop.f32.mrf.mxu0
      %v238 = vadd.f32 0.0, %v237
      %239 = vdwg.mxu0
      %240 = vmatpush.msra.mxu0 0.0
      %241 = vmatpush.msra.mxu0 0.0
      %242 = vmatpush.msra.mxu0 0.0
      %243 = vmatpush.msra.mxu0 0.0
      %244 = vmatpush.msra.mxu0 0.0
      %245 = vmatpush.msra.mxu0 0.0
      %246 = vmatpush.msra.mxu0 0.0
      %247 = vmatpush.msra.mxu0 0.0
      %248 = vmatpush.msra.mxu0 0.0
      %249 = vmatpush.msra.mxu0 0.0
      %250 = vmatpush.msra.mxu0 0.0
      %251 = vmatpush.msra.mxu0 0.0
      %252 = vmatpush.msra.mxu0 0.0
      %253 = vmatpush.msra.mxu0 0.0
      %254 = vmatpush.msra.mxu0 0.0
      %255 = vmatpush.msra.mxu0 %v216
      %256 = vmatmul.f32.gmra.mxu0 %v211
      %v257 = vpop.f32.mrf.mxu0
      %v258 = vadd.f32 0.0, %v257
      %259 = vdwg.mxu0
      %260 = vmatpush.msra.mxu0 0.0
      %261 = vmatpush.msra.mxu0 0.0
      %262 = vmatpush.msra.mxu0 0.0
      %263 = vmatpush.msra.mxu0 0.0
      %264 = vmatpush.msra.mxu0 0.0
      %265 = vmatpush.msra.mxu0 0.0
      %266 = vmatpush.msra.mxu0 0.0
      %267 = vmatpush.msra.mxu0 0.0
      %268 = vmatpush.msra.mxu0 0.0
      %269 = vmatpush.msra.mxu0 0.0
      %270 = vmatpush.msra.mxu0 0.0
      %271 = vmatpush.msra.mxu0 0.0
      %272 = vmatpush.msra.mxu0 0.0
      %273 = vmatpush.msra.mxu0 0.0
      %274 = vmatpush.msra.mxu0 0.0
      %275 = vmatpush.msra.mxu0 %v218
      %276 = vmatmul.f32.gmra.mxu0 %v211
      %v277 = vpop.f32.mrf.mxu0
      %v278 = vadd.f32 0.0, %v277
      %279 = vdwg.mxu0
      %v280 = vld [vmem:[%s3] sm:$0xff]
      %282 = vset.pattern.permute.xlu0 0
      %283 = vperm.xlu0 %282, %v280
      %v284 = vpop.permute.xlu0 %283
      %v286 = vld [vmem:[%s2] sm:$0xff]
      %288 = vset.pattern.permute.xlu0 0
      %289 = vperm.xlu0 %288, %v286
      %v290 = vpop.permute.xlu0 %289
      %v292 = vmul.f32 %v238, %v290
      %v293 = vmul.f32 %v258, %v290
      %v294 = vmul.f32 %v278, %v290
      %v295 = vadd.f32 %v284, %v292
      %v296 = vadd.f32 %v284, %v293
      %v297 = vadd.f32 %v284, %v294
      %s298 = scalar_lea.vmem %s2, 8
      %v299 = vld [vmem:[%s298] sm:$0xff]
      %301 = vset.pattern.permute.xlu0 0
      %302 = vperm.xlu0 %301, %v299
      %v303 = vpop.permute.xlu0 %302
      %v305 = vmul.f32 %v238, %v303
      %v306 = vmul.f32 %v258, %v303
      %v307 = vmul.f32 %v278, %v303
      %311 = vrot.lane.b32.xlu0 %v305, 127
      %v312 = vpop.permute.xlu0 %311
      %313 = vrot.lane.b32.xlu0 %v306, 127
      %v314 = vpop.permute.xlu0 %313
      %315 = vrot.lane.b32.xlu0 %v307, 127
      %v316 = vpop.permute.xlu0 %315
      %vm317 = vcmask 1039360
      %v318 = vsel %vm317, %v312, %v314
      %v319 = vsel %vm317, %v314, %v316
      %v323 = vadd.f32 %v295, %v318
      %v324 = vadd.f32 %v296, %v319
      %v325 = vadd.f32 %v297, %v316
      %s326 = scalar_lea.vmem %s2, 16
      %v327 = vld [vmem:[%s326] sm:$0xff]
      %329 = vset.pattern.permute.xlu0 0
      %330 = vperm.xlu0 %329, %v327
      %v331 = vpop.permute.xlu0 %330
      %v333 = vmul.f32 %v238, %v331
      %v334 = vmul.f32 %v258, %v331
      %v335 = vmul.f32 %v278, %v331
      %339 = vrot.lane.b32.xlu0 %v333, 126
      %v340 = vpop.permute.xlu0 %339
      %341 = vrot.lane.b32.xlu0 %v334, 126
      %v342 = vpop.permute.xlu0 %341
      %343 = vrot.lane.b32.xlu0 %v335, 126
      %v344 = vpop.permute.xlu0 %343
      %vm345 = vcmask 1031168
      %v346 = vsel %vm345, %v340, %v342
      %v347 = vsel %vm345, %v342, %v344
      %v351 = vadd.f32 %v323, %v346
      %v352 = vadd.f32 %v324, %v347
      %v353 = vadd.f32 %v325, %v344
      %s354 = scalar_lea.vmem %s2, 24
      %v355 = vld [vmem:[%s354] sm:$0xff]
      %357 = vset.pattern.permute.xlu0 0
      %358 = vperm.xlu0 %357, %v355
      %v359 = vpop.permute.xlu0 %358
      %v361 = vmul.f32 %v238, %v359
      %v362 = vmul.f32 %v258, %v359
      %v363 = vmul.f32 %v278, %v359
      %367 = vrot.lane.b32.xlu0 %v361, 112
      %v368 = vpop.permute.xlu0 %367
      %369 = vrot.lane.b32.xlu0 %v362, 112
      %v370 = vpop.permute.xlu0 %369
      %371 = vrot.lane.b32.xlu0 %v363, 112
      %v372 = vpop.permute.xlu0 %371
      %vm373 = vcmask 916480
      %v374 = vsel %vm373, %v368, %v370
      %v375 = vsel %vm373, %v370, %v372
      %v379 = vadd.f32 %v351, %v374
      %v380 = vadd.f32 %v352, %v375
      %v381 = vadd.f32 %v353, %v372
      %s382 = scalar_lea.vmem %s2, 32
      %v383 = vld [vmem:[%s382] sm:$0xff]
      %385 = vset.pattern.permute.xlu0 0
      %386 = vperm.xlu0 %385, %v383
      %v387 = vpop.permute.xlu0 %386
      %v389 = vmul.f32 %v238, %v387
      %v390 = vmul.f32 %v258, %v387
      %v391 = vmul.f32 %v278, %v387
      %395 = vrot.lane.b32.xlu0 %v389, 111
      %v396 = vpop.permute.xlu0 %395
      %397 = vrot.lane.b32.xlu0 %v390, 111
      %v398 = vpop.permute.xlu0 %397
      %399 = vrot.lane.b32.xlu0 %v391, 111
      %v400 = vpop.permute.xlu0 %399
      %vm401 = vcmask 908288
      %v402 = vsel %vm401, %v396, %v398
      %v403 = vsel %vm401, %v398, %v400
      %v407 = vadd.f32 %v379, %v402
      %v408 = vadd.f32 %v380, %v403
      %v409 = vadd.f32 %v381, %v400
      %s410 = scalar_lea.vmem %s2, 40
      %v411 = vld [vmem:[%s410] sm:$0xff]
      %413 = vset.pattern.permute.xlu0 0
      %414 = vperm.xlu0 %413, %v411
      %v415 = vpop.permute.xlu0 %414
      %v417 = vmul.f32 %v238, %v415
      %v418 = vmul.f32 %v258, %v415
      %v419 = vmul.f32 %v278, %v415
      %423 = vrot.lane.b32.xlu0 %v417, 110
      %v424 = vpop.permute.xlu0 %423
      %425 = vrot.lane.b32.xlu0 %v418, 110
      %v426 = vpop.permute.xlu0 %425
      %427 = vrot.lane.b32.xlu0 %v419, 110
      %v428 = vpop.permute.xlu0 %427
      %vm429 = vcmask 900096
      %v430 = vsel %vm429, %v424, %v426
      %v431 = vsel %vm429, %v426, %v428
      %v435 = vadd.f32 %v407, %v430
      %v436 = vadd.f32 %v408, %v431
      %v437 = vadd.f32 %v409, %v428
      %s438 = scalar_lea.vmem %s2, 48
      %v439 = vld [vmem:[%s438] sm:$0xff]
      %441 = vset.pattern.permute.xlu0 0
      %442 = vperm.xlu0 %441, %v439
      %v443 = vpop.permute.xlu0 %442
      %v445 = vmul.f32 %v238, %v443
      %v446 = vmul.f32 %v258, %v443
      %v447 = vmul.f32 %v278, %v443
      %451 = vrot.lane.b32.xlu0 %v445, 96
      %v452 = vpop.permute.xlu0 %451
      %453 = vrot.lane.b32.xlu0 %v446, 96
      %v454 = vpop.permute.xlu0 %453
      %455 = vrot.lane.b32.xlu0 %v447, 96
      %v456 = vpop.permute.xlu0 %455
      %vm457 = vcmask 785408
      %v458 = vsel %vm457, %v452, %v454
      %v459 = vsel %vm457, %v454, %v456
      %v463 = vadd.f32 %v435, %v458
      %v464 = vadd.f32 %v436, %v459
      %v465 = vadd.f32 %v437, %v456
      %s466 = scalar_lea.vmem %s2, 56
      %v467 = vld [vmem:[%s466] sm:$0xff]
      %469 = vset.pattern.permute.xlu0 0
      %470 = vperm.xlu0 %469, %v467
      %v471 = vpop.permute.xlu0 %470
      %v473 = vmul.f32 %v238, %v471
      %v474 = vmul.f32 %v258, %v471
      %v475 = vmul.f32 %v278, %v471
      %479 = vrot.lane.b32.xlu0 %v473, 95
      %v480 = vpop.permute.xlu0 %479
      %481 = vrot.lane.b32.xlu0 %v474, 95
      %v482 = vpop.permute.xlu0 %481
      %483 = vrot.lane.b32.xlu0 %v475, 95
      %v484 = vpop.permute.xlu0 %483
      %vm485 = vcmask 777216
      %v486 = vsel %vm485, %v480, %v482
      %v487 = vsel %vm485, %v482, %v484
      %v491 = vadd.f32 %v463, %v486
      %v492 = vadd.f32 %v464, %v487
      %v493 = vadd.f32 %v465, %v484
      %s494 = scalar_lea.vmem %s2, 64
      %v495 = vld [vmem:[%s494] sm:$0xff]
      %497 = vset.pattern.permute.xlu0 0
      %498 = vperm.xlu0 %497, %v495
      %v499 = vpop.permute.xlu0 %498
      %v501 = vmul.f32 %v238, %v499
      %v502 = vmul.f32 %v258, %v499
      %v503 = vmul.f32 %v278, %v499
      %507 = vrot.lane.b32.xlu0 %v501, 94
      %v508 = vpop.permute.xlu0 %507
      %509 = vrot.lane.b32.xlu0 %v502, 94
      %v510 = vpop.permute.xlu0 %509
      %511 = vrot.lane.b32.xlu0 %v503, 94
      %v512 = vpop.permute.xlu0 %511
      %vm513 = vcmask 769024
      %v514 = vsel %vm513, %v508, %v510
      %v515 = vsel %vm513, %v510, %v512
      %v519 = vadd.f32 %v491, %v514
      %v520 = vadd.f32 %v492, %v515
      %v521 = vadd.f32 %v493, %v512
      %525 = vrot.lane.b32.xlu0 %v519, 111
      %v526 = vpop.permute.xlu0 %525
      %527 = vrot.lane.b32.xlu0 %v520, 111
      %v528 = vpop.permute.xlu0 %527
      %529 = vrot.lane.b32.xlu0 %v521, 111
      %v530 = vpop.permute.xlu0 %529
      %v531 = vsel %vm401, %v526, %v528
      %v532 = vsel %vm401, %v528, %v530
      %535 = vst [vmem:[%s197] sm:$0xff] %v531
      %536 = vst [vmem:[%s197 + $0x8] sm:$0xff] %v532
      %p537 = scmp.lt.s32.totalorder %s15, 1
      %s538 = scalar_select %p537, %s15, 1
      %s539 = smul.addr %s538, 2
      %s540 = smul.addr %s539, 8
      %s541 = scalar_lea.vmem %s4, %s540
      // Predicated region
      $region37: #{separable_windowed_conv2d.1} parent=35 // pred_check
        %p542 = pneg %p122
      $region38: #{separable_windowed_conv2d.1} parent=35 // pred_check_branch
        %544 = sbr.rel (%p542) target = $region40
      $region39: #{separable_windowed_conv2d.1} parent=35 // pred_region
        _
      $region40: #{separable_windowed_conv2d.1} parent=35 // pred_fallthru
        _
    $region36: #{separable_windowed_conv2d.1} parent=5 // pred_fallthru
      _
    %p545 = scmp.le.s32.totalorder 2, %s10
    // Predicated region
    $region41: #{separable_windowed_conv2d.1} parent=5 // pred_check
      %p546 = pneg %p545
    $region42: #{separable_windowed_conv2d.1} parent=5 // pred_check_branch
      %548 = sbr.rel (%p546) target = $region44
    $region43: #{separable_windowed_conv2d.1} parent=5 // pred_region
      %s549 = ssub.s32 %s10, 2
      // Predicated region
      $region45: #{separable_windowed_conv2d.1} parent=43 // pred_check
        %p550 = pneg %p128
      $region46: #{separable_windowed_conv2d.1} parent=43 // pred_check_branch
        %552 = sbr.rel (%p550) target = $region48
      $region47: #{separable_windowed_conv2d.1} parent=43 // pred_region
        %p553 = scmp.lt.s32.totalorder %s16, 1
        %s554 = scalar_select %p553, %s16, 1
        %s555 = smul.addr %s554, 2
        %s556 = smul.addr %s555, 8
        %s557 = scalar_lea.vmem %s4, %s556
      $region48: #{separable_windowed_conv2d.1} parent=43 // pred_fallthru
        _
    $region44: #{separable_windowed_conv2d.1} parent=5 // pred_fallthru
      _
  $region6: #{separable_windowed_conv2d.1} parent=0 // loop_footer
    %s14 = sadd.s32 1, %s10
  $region7: #{separable_windowed_conv2d.1} parent=0 // loop_footer_branch
    %9 = sbr.rel target = $region3
  $region8: #{separable_windowed_conv2d.1} parent=0 // loop_exit
    _

</llo_original>
